<compile_context>
chip_gen: v7x
topology: tpu7x:2x2x1
jax: 0.10.0
libtpu: 0.0.40
codegen_flags: <defaults>
</compile_context>

<pallas_src>
import functools

import jax
import jax.numpy as jnp
from jax import lax
from jax.experimental import pallas as pl
from jax.experimental.pallas import tpu as pltpu


_LN_EPS = 1e-5  # torch.nn.LayerNorm default


def _mixer_half_kernel(x_ref, g_ref, b_ref, w1_ref, b1_ref, w2_ref, b2_ref,
                       *rest, has_mask):
    """out = x + dropout( (relu(LN(x) @ W1 + b1)) @ W2 + b2 )

    x_ref / o_ref : (TR, D) row tile, full feature dim
    g/b           : (1, D)  LayerNorm affine
    w1 (D, H), b1 (1, H), w2 (H, D), b2 (1, D)
    optional mask : (TR, D) pre-scaled dropout keep mask
    """
    if has_mask:
        mask_ref, o_ref = rest
    else:
        (o_ref,) = rest

    x = x_ref[...].astype(jnp.float32)

    # LayerNorm over the last (lane) dim.
    mu = jnp.mean(x, axis=-1, keepdims=True)
    xc = x - mu
    var = jnp.mean(xc * xc, axis=-1, keepdims=True)
    y = xc * lax.rsqrt(var + _LN_EPS)
    y = y * g_ref[...].astype(jnp.float32) + b_ref[...].astype(jnp.float32)

    # MLP on the MXU with f32 accumulation.
    h = jnp.dot(y, w1_ref[...].astype(jnp.float32),
                preferred_element_type=jnp.float32) + b1_ref[...].astype(jnp.float32)
    h = jnp.maximum(h, 0.0)
    z = jnp.dot(h, w2_ref[...].astype(jnp.float32),
                preferred_element_type=jnp.float32) + b2_ref[...].astype(jnp.float32)

    if has_mask:
        z = z * mask_ref[...].astype(jnp.float32)

    o_ref[...] = (x + z).astype(o_ref.dtype)


def _pick_row_tile(rows, d, itemsize, max_block_bytes=2 << 20):
    """Row-tile: multiple of 8, ~<=2 MiB/block (v7x-safe), capped at 1024 rows."""
    if rows <= 8:
        return rows
    tr = max_block_bytes // max(1, d * itemsize)
    tr = max(8, min(1024, (tr // 8) * 8))
    return rows if tr >= rows else tr


def _mixer_half(x2d, gamma, beta, w1, b1, w2, b2, mask2d=None):
    rows, d = x2d.shape
    h = w1.shape[1]
    tr = _pick_row_tile(rows, d, x2d.dtype.itemsize)
    grid = (pl.cdiv(rows, tr),)

    row_spec = pl.BlockSpec((tr, d), lambda i: (i, 0))
    def full(shape):
        return pl.BlockSpec(shape, lambda i: (0, 0))

    in_specs = [
        row_spec,          # x
        full((1, d)),      # gamma
        full((1, d)),      # beta
        full((d, h)),      # w1
        full((1, h)),      # b1
        full((h, d)),      # w2
        full((1, d)),      # b2
    ]
    args = [x2d, gamma.reshape(1, d), beta.reshape(1, d),
            w1, b1.reshape(1, h), w2, b2.reshape(1, d)]

    has_mask = mask2d is not None
    if has_mask:
        in_specs.append(row_spec)
        args.append(mask2d)

    kernel = functools.partial(_mixer_half_kernel, has_mask=has_mask)
    return pl.pallas_call(
        kernel,
        out_shape=jax.ShapeDtypeStruct((rows, d), x2d.dtype),
        grid=grid,
        in_specs=in_specs,
        out_specs=row_spec,
        compiler_params=pltpu.CompilerParams(
            dimension_semantics=("parallel",)),
    )(*args)


def mixer_forward(x, params, dropout_masks=None):
    """x: (B, patch, channel).  dropout_masks: None (eval mode) or a tuple
    (mask1 (B, channel, patch), mask2 (B, patch, channel)) of pre-scaled keep
    masks (bernoulli(1-p)/(1-p))."""
    B, P, C = x.shape
    m1 = m2 = None
    if dropout_masks is not None:
        m1, m2 = dropout_masks

    # --- token (patch) mixing: LayerNorm(patch) + MLP over the patch dim ---
    xt = jnp.swapaxes(x, -2, -1)                    # (B, C, P)
    xt2d = xt.reshape(B * C, P)
    m1_2d = None if m1 is None else m1.reshape(B * C, P).astype(x.dtype)
    y = _mixer_half(xt2d, params["ln1_g"], params["ln1_b"],
                    params["w1"], params["b1"], params["w2"], params["b2"],
                    m1_2d)
    x1 = jnp.swapaxes(y.reshape(B, C, P), -2, -1)   # (B, P, C)

    # --- channel mixing: LayerNorm(channel) + MLP over the channel dim ---
    x2d = x1.reshape(B * P, C)
    m2_2d = None if m2 is None else m2.reshape(B * P, C).astype(x.dtype)
    y = _mixer_half(x2d, params["ln2_g"], params["ln2_b"],
                    params["w3"], params["b3"], params["w4"], params["b4"],
                    m2_2d)
    return y.reshape(B, P, C)


def init_mixer_params(rng, patch, channel, hidden, dtype=jnp.float32):
    """Kaiming-normal weights, zero biases, unit LayerNorm affine (as in spec)."""
    k = jax.random.split(rng, 4)

    def kaiming(key, fan_in, shape):
        return (jax.random.normal(key, shape, dtype=jnp.float32)
                * jnp.sqrt(2.0 / fan_in)).astype(dtype)

    return {
        "ln1_g": jnp.ones((patch,), dtype), "ln1_b": jnp.zeros((patch,), dtype),
        "w1": kaiming(k[0], patch, (patch, hidden)),
        "b1": jnp.zeros((hidden,), dtype),
        "w2": kaiming(k[1], hidden, (hidden, patch)),
        "b2": jnp.zeros((patch,), dtype),
        "ln2_g": jnp.ones((channel,), dtype), "ln2_b": jnp.zeros((channel,), dtype),
        "w3": kaiming(k[2], channel, (channel, hidden)),
        "b3": jnp.zeros((hidden,), dtype),
        "w4": kaiming(k[3], hidden, (hidden, channel)),
        "b4": jnp.zeros((channel,), dtype),
    }


def make_dropout_masks(rng, p, batch, patch, channel, dtype=jnp.float32):
    """Inverted-dropout keep masks (generated in plain JAX, no in-kernel PRNG)."""
    assert 0.0 <= p < 1.0, "dropout p must be in [0, 1)"
    if p == 0.0:
        return None
    k1, k2 = jax.random.split(rng)
    keep = 1.0 - p
    m1 = jax.random.bernoulli(k1, keep, (batch, channel, patch)).astype(dtype) / keep
    m2 = jax.random.bernoulli(k2, keep, (batch, patch, channel)).astype(dtype) / keep
    return m1, m2


def mixer_reference(x, params, dropout_masks=None):
    """Pure-JAX reference matching the PyTorch forward."""
    def ln(v, g, b):
        mu = jnp.mean(v, axis=-1, keepdims=True)
        var = jnp.mean((v - mu) ** 2, axis=-1, keepdims=True)
        return (v - mu) * lax.rsqrt(var + _LN_EPS) * g + b

    m1 = m2 = None
    if dropout_masks is not None:
        m1, m2 = dropout_masks

    xt = jnp.swapaxes(x, -2, -1)
    z = jnp.maximum(ln(xt, params["ln1_g"], params["ln1_b"]) @ params["w1"]
                    + params["b1"], 0.0) @ params["w2"] + params["b2"]
    if m1 is not None:
        z = z * m1
    xt = xt + z
    x1 = jnp.swapaxes(xt, -2, -1)
    z = jnp.maximum(ln(x1, params["ln2_g"], params["ln2_b"]) @ params["w3"]
                    + params["b3"], 0.0) @ params["w4"] + params["b4"]
    if m2 is not None:
        z = z * m2
    return x1 + z


if __name__ == "__main__":
    batch, patch, channel, hidden = 2, 16, 4, 32
    dropout = 0.1

    root = jax.random.PRNGKey(0)
    kx, kp, km = jax.random.split(root, 3)
    x = jax.random.normal(kx, (batch, patch, channel), dtype=jnp.float32)
    params = init_mixer_params(kp, patch, channel, hidden)

    # Eval-mode forward (dropout is identity), matching module.eval().
    out = jax.block_until_ready(mixer_forward(x, params))
    ref = mixer_reference(x, params)
    assert out.shape == (batch, patch, channel)
    assert out.dtype == x.dtype
    assert jnp.allclose(out, ref, atol=1e-5, rtol=1e-5), "eval-mode mismatch"

    # Train-mode coverage: masks built in plain JAX, applied inside the kernel.
    masks = make_dropout_masks(km, dropout, batch, patch, channel)
    out_tr = jax.block_until_ready(mixer_forward(x, params, dropout_masks=masks))
    ref_tr = mixer_reference(x, params, dropout_masks=masks)
    assert jnp.allclose(out_tr, ref_tr, atol=1e-5, rtol=1e-5), "train-mode mismatch"

    print("KERNEL_OK")
</pallas_src>

<mosaic_0001>
module attributes {stable_mosaic.version = 11 : i64} {
  func.func @_mixer_half_kernel(%arg0: i32, %arg1: memref<8x16xf32, #tpu.memory_space<vmem>>, %arg2: memref<1x16xf32, #tpu.memory_space<vmem>>, %arg3: memref<1x16xf32, #tpu.memory_space<vmem>>, %arg4: memref<16x32xf32, #tpu.memory_space<vmem>>, %arg5: memref<1x32xf32, #tpu.memory_space<vmem>>, %arg6: memref<32x16xf32, #tpu.memory_space<vmem>>, %arg7: memref<1x16xf32, #tpu.memory_space<vmem>>, %arg8: memref<8x16xf32, #tpu.memory_space<vmem>>) attributes {dimension_semantics = [#tpu.dimension_semantics<parallel>], iteration_bounds = array<i64: 1>, scalar_prefetch = 0 : i64, scratch_operands = 0 : i64, tpu.core_type = #tpu.core_type<tc>, window_params = [{transform_indices = @transform_0, window_bounds = array<i64: 8, 16>}, {pipeline_mode = #tpu.pipeline_mode<synchronous>, transform_indices = @transform_1, window_bounds = array<i64: 1, 16>}, {pipeline_mode = #tpu.pipeline_mode<synchronous>, transform_indices = @transform_2, window_bounds = array<i64: 1, 16>}, {pipeline_mode = #tpu.pipeline_mode<synchronous>, transform_indices = @transform_3, window_bounds = array<i64: 16, 32>}, {pipeline_mode = #tpu.pipeline_mode<synchronous>, transform_indices = @transform_4, window_bounds = array<i64: 1, 32>}, {pipeline_mode = #tpu.pipeline_mode<synchronous>, transform_indices = @transform_5, window_bounds = array<i64: 32, 16>}, {pipeline_mode = #tpu.pipeline_mode<synchronous>, transform_indices = @transform_6, window_bounds = array<i64: 1, 16>}, {transform_indices = @transform_7, window_bounds = array<i64: 8, 16>}]} {
    %c0 = arith.constant 0 : index
    %c0_0 = arith.constant 0 : index
    %0 = vector.load %arg1[%c0, %c0_0] : memref<8x16xf32, #tpu.memory_space<vmem>>, vector<8x16xf32>
    %cst = arith.constant dense<0.000000e+00> : vector<8xf32>
    %1 = vector.multi_reduction <add>, %0, %cst [1] : vector<8x16xf32> to vector<8xf32>
    %2 = vector.shape_cast %1 : vector<8xf32> to vector<8x1xf32>
    %cst_1 = arith.constant 1.600000e+01 : f32
    %3 = vector.broadcast %cst_1 : f32 to vector<8x1xf32>
    %4 = arith.divf %2, %3 : vector<8x1xf32>
    %5 = vector.broadcast %4 : vector<8x1xf32> to vector<8x16xf32>
    %6 = arith.subf %0, %5 : vector<8x16xf32>
    %7 = arith.mulf %6, %6 : vector<8x16xf32>
    %cst_2 = arith.constant dense<0.000000e+00> : vector<8xf32>
    %8 = vector.multi_reduction <add>, %7, %cst_2 [1] : vector<8x16xf32> to vector<8xf32>
    %9 = vector.shape_cast %8 : vector<8xf32> to vector<8x1xf32>
    %cst_3 = arith.constant 1.600000e+01 : f32
    %10 = vector.broadcast %cst_3 : f32 to vector<8x1xf32>
    %11 = arith.divf %9, %10 : vector<8x1xf32>
    %cst_4 = arith.constant 9.99999974E-6 : f32
    %12 = vector.broadcast %cst_4 : f32 to vector<8x1xf32>
    %13 = arith.addf %11, %12 : vector<8x1xf32>
    %14 = math.rsqrt %13 : vector<8x1xf32>
    %15 = vector.broadcast %14 : vector<8x1xf32> to vector<8x16xf32>
    %16 = arith.mulf %6, %15 : vector<8x16xf32>
    %c0_5 = arith.constant 0 : index
    %c0_6 = arith.constant 0 : index
    %17 = vector.load %arg2[%c0_5, %c0_6] : memref<1x16xf32, #tpu.memory_space<vmem>>, vector<1x16xf32>
    %18 = vector.broadcast %17 : vector<1x16xf32> to vector<8x16xf32>
    %19 = arith.mulf %16, %18 : vector<8x16xf32>
    %c0_7 = arith.constant 0 : index
    %c0_8 = arith.constant 0 : index
    %20 = vector.load %arg3[%c0_7, %c0_8] : memref<1x16xf32, #tpu.memory_space<vmem>>, vector<1x16xf32>
    %21 = vector.broadcast %20 : vector<1x16xf32> to vector<8x16xf32>
    %22 = arith.addf %19, %21 : vector<8x16xf32>
    %c0_9 = arith.constant 0 : index
    %c0_10 = arith.constant 0 : index
    %23 = vector.load %arg4[%c0_9, %c0_10] : memref<16x32xf32, #tpu.memory_space<vmem>>, vector<16x32xf32>
    %cst_11 = arith.constant dense<0.000000e+00> : vector<8x32xf32>
    %24 = tpu.matmul %22, %23, %cst_11 {dimension_numbers = #tpu.dot_dimension_numbers<[1], [0], [0], [1], [0, 0, 1, 1], [], []>} : vector<8x16xf32>, vector<16x32xf32>, vector<8x32xf32> -> vector<8x32xf32>
    %c0_12 = arith.constant 0 : index
    %c0_13 = arith.constant 0 : index
    %25 = vector.load %arg5[%c0_12, %c0_13] : memref<1x32xf32, #tpu.memory_space<vmem>>, vector<1x32xf32>
    %26 = vector.broadcast %25 : vector<1x32xf32> to vector<8x32xf32>
    %27 = arith.addf %24, %26 : vector<8x32xf32>
    %cst_14 = arith.constant 0.000000e+00 : f32
    %28 = vector.broadcast %cst_14 : f32 to vector<8x32xf32>
    %29 = arith.maximumf %27, %28 : vector<8x32xf32>
    %c0_15 = arith.constant 0 : index
    %c0_16 = arith.constant 0 : index
    %30 = vector.load %arg6[%c0_15, %c0_16] : memref<32x16xf32, #tpu.memory_space<vmem>>, vector<32x16xf32>
    %cst_17 = arith.constant dense<0.000000e+00> : vector<8x16xf32>
    %31 = tpu.matmul %29, %30, %cst_17 {dimension_numbers = #tpu.dot_dimension_numbers<[1], [0], [0], [1], [0, 0, 1, 1], [], []>} : vector<8x32xf32>, vector<32x16xf32>, vector<8x16xf32> -> vector<8x16xf32>
    %c0_18 = arith.constant 0 : index
    %c0_19 = arith.constant 0 : index
    %32 = vector.load %arg7[%c0_18, %c0_19] : memref<1x16xf32, #tpu.memory_space<vmem>>, vector<1x16xf32>
    %33 = vector.broadcast %32 : vector<1x16xf32> to vector<8x16xf32>
    %34 = arith.addf %31, %33 : vector<8x16xf32>
    %35 = arith.addf %0, %34 : vector<8x16xf32>
    %c0_20 = arith.constant 0 : index
    %c0_21 = arith.constant 0 : index
    %36 = vector.load %arg8[%c0_20, %c0_21] : memref<8x16xf32, #tpu.memory_space<vmem>>, vector<8x16xf32>
    tpu.vector_store %arg8[%c0_20, %c0_21], %35 {strides = array<i32>} : memref<8x16xf32, #tpu.memory_space<vmem>>, vector<8x16xf32>,
    return
  }
  func.func @transform_0(%arg0: i32) -> (i32, i32) {
    %c0_i32 = arith.constant 0 : i32
    %c0_i32_0 = arith.constant 0 : i32
    return %arg0, %c0_i32 : i32, i32
  }
  func.func @transform_1(%arg0: i32) -> (i32, i32) {
    %c0_i32 = arith.constant 0 : i32
    %c0_i32_0 = arith.constant 0 : i32
    %c0_i32_1 = arith.constant 0 : i32
    return %c0_i32, %c0_i32_0 : i32, i32
  }
  func.func @transform_2(%arg0: i32) -> (i32, i32) {
    %c0_i32 = arith.constant 0 : i32
    %c0_i32_0 = arith.constant 0 : i32
    %c0_i32_1 = arith.constant 0 : i32
    return %c0_i32, %c0_i32_0 : i32, i32
  }
  func.func @transform_3(%arg0: i32) -> (i32, i32) {
    %c0_i32 = arith.constant 0 : i32
    %c0_i32_0 = arith.constant 0 : i32
    %c0_i32_1 = arith.constant 0 : i32
    return %c0_i32, %c0_i32_0 : i32, i32
  }
  func.func @transform_4(%arg0: i32) -> (i32, i32) {
    %c0_i32 = arith.constant 0 : i32
    %c0_i32_0 = arith.constant 0 : i32
    %c0_i32_1 = arith.constant 0 : i32
    return %c0_i32, %c0_i32_0 : i32, i32
  }
  func.func @transform_5(%arg0: i32) -> (i32, i32) {
    %c0_i32 = arith.constant 0 : i32
    %c0_i32_0 = arith.constant 0 : i32
    %c0_i32_1 = arith.constant 0 : i32
    return %c0_i32, %c0_i32_0 : i32, i32
  }
  func.func @transform_6(%arg0: i32) -> (i32, i32) {
    %c0_i32 = arith.constant 0 : i32
    %c0_i32_0 = arith.constant 0 : i32
    %c0_i32_1 = arith.constant 0 : i32
    return %c0_i32, %c0_i32_0 : i32, i32
  }
  func.func @transform_7(%arg0: i32) -> (i32, i32) {
    %c0_i32 = arith.constant 0 : i32
    %c0_i32_0 = arith.constant 0 : i32
    return %arg0, %c0_i32 : i32, i32
  }
}

</mosaic_0001>

<llo_original>
// kernel: tpu_custom_call.1
$region0: #{tpu_custom_call.1}
  #allocation0 [shape = 'u32[]', space=smem, size = 0x4, offset = 0x4, fixed_abs, tag = 'smem constant byte address 0x4 - core index']
  #allocation1 [shape = 'u32[144,128]{1,0:T(1,128)}', space=vmem, size = 0x12000, scoped, tag = 'internal scratch']
  %s0 = inlined_call_operand.vmem [shape: f32[8,16], index: 0, kind: input, shape index: {}]
  %s1 = inlined_call_operand.vmem [shape: f32[1,16], index: 1, kind: input, shape index: {}]
  %s2 = inlined_call_operand.vmem [shape: f32[1,16], index: 2, kind: input, shape index: {}]
  %s3 = inlined_call_operand.vmem [shape: f32[16,32], index: 3, kind: input, shape index: {}]
  %s4 = inlined_call_operand.vmem [shape: f32[1,32], index: 4, kind: input, shape index: {}]
  %s5 = inlined_call_operand.vmem [shape: f32[32,16], index: 5, kind: input, shape index: {}]
  %s6 = inlined_call_operand.vmem [shape: f32[1,16], index: 6, kind: input, shape index: {}]
  %s7 = inlined_call_operand.hbm [shape: f32[8,16], index: 7, kind: output, shape index: {}]
  %s8 = sld [smem:[#allocation0]]
  $region38: #{tpu_custom_call.1} parent=0
    _
  %s10 = ssub.s32 1, %s8
  %s11 = scalar_select 0, %s10, %s8
  $region1: #{tpu_custom_call.1} parent=0
    #allocation2 [shape = 'u8[4096]{0}', space=vmem, size = 0x1000, scoped, tag = 'output window, operand 0, single buffered']
    #allocation3 [shape = 's32[1]{0}', space=sflag, size = 0x4, scoped, tag = 'scoped memory for tpu_custom_call.1']
    %12 = vsyncpa [#allocation3], 0
    // Predicated region
    $region2: #{tpu_custom_call.1} parent=1 // pred_check
      _
    $region3: #{tpu_custom_call.1} parent=1 // pred_check_branch
      %14 = sbr.rel (0) target = $region5
    $region4: #{tpu_custom_call.1} parent=1 // pred_region
      _
    $region5: #{tpu_custom_call.1} parent=1 // pred_fallthru
      _
    // Predicated region
    $region6: #{tpu_custom_call.1} parent=1 // pred_check
      _
    $region7: #{tpu_custom_call.1} parent=1 // pred_check_branch
      %16 = sbr.rel (0) target = $region9
    $region8: #{tpu_custom_call.1} parent=1 // pred_region
      _
    $region9: #{tpu_custom_call.1} parent=1 // pred_fallthru
      _
    // Predicated region
    $region10: #{tpu_custom_call.1} parent=1 // pred_check
      _
    $region11: #{tpu_custom_call.1} parent=1 // pred_check_branch
      %18 = sbr.rel (0) target = $region13
    $region12: #{tpu_custom_call.1} parent=1 // pred_region
      _
    $region13: #{tpu_custom_call.1} parent=1 // pred_fallthru
      _
    // Predicated region
    $region14: #{tpu_custom_call.1} parent=1 // pred_check
      _
    $region15: #{tpu_custom_call.1} parent=1 // pred_check_branch
      %20 = sbr.rel (0) target = $region17
    $region16: #{tpu_custom_call.1} parent=1 // pred_region
      _
    $region17: #{tpu_custom_call.1} parent=1 // pred_fallthru
      _
    // Predicated region
    $region18: #{tpu_custom_call.1} parent=1 // pred_check
      _
    $region19: #{tpu_custom_call.1} parent=1 // pred_check_branch
      %22 = sbr.rel (0) target = $region21
    $region20: #{tpu_custom_call.1} parent=1 // pred_region
      _
    $region21: #{tpu_custom_call.1} parent=1 // pred_fallthru
      _
    // Predicated region
    $region22: #{tpu_custom_call.1} parent=1 // pred_check
      _
    $region23: #{tpu_custom_call.1} parent=1 // pred_check_branch
      %24 = sbr.rel (0) target = $region25
    $region24: #{tpu_custom_call.1} parent=1 // pred_region
      _
    $region25: #{tpu_custom_call.1} parent=1 // pred_fallthru
      _
    // Predicated region
    $region26: #{tpu_custom_call.1} parent=1 // pred_check
      _
    $region27: #{tpu_custom_call.1} parent=1 // pred_check_branch
      %26 = sbr.rel (0) target = $region29
    $region28: #{tpu_custom_call.1} parent=1 // pred_region
      _
    $region29: #{tpu_custom_call.1} parent=1 // pred_fallthru
      _
    %v27 = vld [vmem:[%s0] sm:$0xff]
    %vm28 = vcmask 130048
    %v29 = vsel %vm28, %v27, 0.0
    %30 = vadd.xlane.f32.xlu0 %v29
    %v31 = vpop.xlane.xlu0 %30
    %v32 = vrcp.pop 16.0
    %v33 = vmul.f32 %v31, %v32
    %v34 = vsub.f32 %v27, %v33
    %v35 = vmul.f32 %v34, %v34
    %v36 = vsel %vm28, %v35, 0.0
    %37 = vadd.xlane.f32.xlu0 %v36
    %v38 = vpop.xlane.xlu0 %37
    %v39 = vmul.f32 %v38, %v32
    %v40 = vadd.f32 %v39, 1e-05
    %v41 = vrsqrt.pop %v40
    %v42 = vmul.f32 %v34, %v41
    %v43 = vld [vmem:[%s1] sm:$0x1]
    %v45 = vlaneseq
    %v46 = vshrl.u32 %v45, 7
    %v47 = vsub.s32 0, %v46
    %v48 = vrot.slane %v43, %v47
    %v50 = vmul.f32 %v42, %v48
    %v51 = vld [vmem:[%s2] sm:$0x1]
    %v53 = vlaneseq
    %v54 = vshrl.u32 %v53, 7
    %v55 = vsub.s32 0, %v54
    %v56 = vrot.slane %v51, %v55
    %v58 = vadd.f32 %v50, %v56
    %v59 = vld [vmem:[%s3] sm:$0xff]
    %v60 = vld [vmem:[%s3 + $0x8] sm:$0xff]
    %v61 = vld [vmem:[%s4] sm:$0x1]
    %v63 = vlaneseq
    %v64 = vshrl.u32 %v63, 7
    %v65 = vsub.s32 0, %v64
    %v66 = vrot.slane %v61, %v65
    %v69 = vsel %vm28, %v58, 0
    %71 = vmatprep.subr.mxu0 0.0
    %72 = vmatpush1.msra.mxu0 %v59
    %73 = vmatprep.subr.mxu0 0.0
    %74 = vmatpush1.msra.mxu0 %v60
    %75 = vmatprep.subr.mxu0 0.0
    %76 = vmatpush1.msra.mxu0 0.0
    %77 = vmatprep.subr.mxu0 0.0
    %78 = vmatpush1.msra.mxu0 0.0
    %79 = vmatprep.subr.mxu0 0.0
    %80 = vmatpush1.msra.mxu0 0.0
    %81 = vmatprep.subr.mxu0 0.0
    %82 = vmatpush1.msra.mxu0 0.0
    %83 = vmatprep.subr.mxu0 0.0
    %84 = vmatpush1.msra.mxu0 0.0
    %85 = vmatprep.subr.mxu0 0.0
    %86 = vmatpush1.msra.mxu0 0.0
    %87 = vmatprep.subr.mxu0 0.0
    %88 = vmatpush1.msra.mxu0 0.0
    %89 = vmatprep.subr.mxu0 0.0
    %90 = vmatpush1.msra.mxu0 0.0
    %91 = vmatprep.subr.mxu0 0.0
    %92 = vmatpush1.msra.mxu0 0.0
    %93 = vmatprep.subr.mxu0 0.0
    %94 = vmatpush1.msra.mxu0 0.0
    %95 = vmatprep.subr.mxu0 0.0
    %96 = vmatpush1.msra.mxu0 0.0
    %97 = vmatprep.subr.mxu0 0.0
    %98 = vmatpush1.msra.mxu0 0.0
    %99 = vmatprep.subr.mxu0 0.0
    %100 = vmatpush1.msra.mxu0 0.0
    %101 = vmatprep.subr.mxu0 0.0
    %102 = vmatpush1.msra.mxu0 0.0
    %103 = vmatprep.subr.mxu0 0.0
    %104 = vmatpush1.msra.mxu0 0.0
    %105 = vmatprep.subr.mxu0 0.0
    %106 = vmatpush1.msra.mxu0 0.0
    %107 = vmatprep.subr.mxu0 0.0
    %108 = vmatpush1.msra.mxu0 0.0
    %109 = vmatprep.subr.mxu0 0.0
    %110 = vmatpush1.msra.mxu0 0.0
    %111 = vmatprep.subr.mxu0 0.0
    %112 = vmatpush1.msra.mxu0 0.0
    %113 = vmatprep.subr.mxu0 0.0
    %114 = vmatpush1.msra.mxu0 0.0
    %115 = vmatprep.subr.mxu0 0.0
    %116 = vmatpush1.msra.mxu0 0.0
    %117 = vmatprep.subr.mxu0 0.0
    %118 = vmatpush1.msra.mxu0 0.0
    %119 = vmatprep.subr.mxu0 0.0
    %120 = vmatpush1.msra.mxu0 0.0
    %121 = vmatprep.subr.mxu0 0.0
    %122 = vmatpush1.msra.mxu0 0.0
    %123 = vmatprep.subr.mxu0 0.0
    %124 = vmatpush1.msra.mxu0 0.0
    %125 = vmatprep.subr.mxu0 0.0
    %126 = vmatpush1.msra.mxu0 0.0
    %127 = vmatprep.subr.mxu0 0.0
    %128 = vmatpush1.msra.mxu0 0.0
    %129 = vmatprep.subr.mxu0 0.0
    %130 = vmatpush1.msra.mxu0 0.0
    %131 = vmatprep.subr.mxu0 0.0
    %132 = vmatpush1.msra.mxu0 0.0
    %133 = vmatprep.subr.mxu0 0.0
    %134 = vmatpush1.msra.mxu0 0.0
    %135 = vmatprep.mubr.f32.mxu0 0.0
    %136 = vmatmul.mubr.f32.gmra.mrb[0].mxu0 %v69
    %v137 = vpop.f32.mrb[0].mxu0
    %v138 = vadd.f32 %v66, %v137
    %v139 = vpop.f32.mrb[0].mxu0
    %140 = vdwg.mxu0
    %v141 = vmax.f32 %v138, 0.0
    %v142 = vld [vmem:[%s5] sm:$0xff]
    %v143 = vld [vmem:[%s5 + $0x8] sm:$0xff]
    %v144 = vld [vmem:[%s5 + $0x10] sm:$0xff]
    %v145 = vld [vmem:[%s5 + $0x18] sm:$0xff]
    %v146 = vld [vmem:[%s6] sm:$0x1]
    %v148 = vlaneseq
    %v149 = vshrl.u32 %v148, 7
    %v150 = vsub.s32 0, %v149
    %v151 = vrot.slane %v146, %v150
    %vm153 = vcmask 261120
    %v155 = vsel %vm153, %v141, 0
    %157 = vmatprep.subr.mxu0 0.0
    %158 = vmatpush1.msra.mxu0 %v142
    %159 = vmatprep.subr.mxu0 0.0
    %160 = vmatpush1.msra.mxu0 %v143
    %161 = vmatprep.subr.mxu0 0.0
    %162 = vmatpush1.msra.mxu0 %v144
    %163 = vmatprep.subr.mxu0 0.0
    %164 = vmatpush1.msra.mxu0 %v145
    %165 = vmatprep.subr.mxu0 0.0
    %166 = vmatpush1.msra.mxu0 0.0
    %167 = vmatprep.subr.mxu0 0.0
    %168 = vmatpush1.msra.mxu0 0.0
    %169 = vmatprep.subr.mxu0 0.0
    %170 = vmatpush1.msra.mxu0 0.0
    %171 = vmatprep.subr.mxu0 0.0
    %172 = vmatpush1.msra.mxu0 0.0
    %173 = vmatprep.subr.mxu0 0.0
    %174 = vmatpush1.msra.mxu0 0.0
    %175 = vmatprep.subr.mxu0 0.0
    %176 = vmatpush1.msra.mxu0 0.0
    %177 = vmatprep.subr.mxu0 0.0
    %178 = vmatpush1.msra.mxu0 0.0
    %179 = vmatprep.subr.mxu0 0.0
    %180 = vmatpush1.msra.mxu0 0.0
    %181 = vmatprep.subr.mxu0 0.0
    %182 = vmatpush1.msra.mxu0 0.0
    %183 = vmatprep.subr.mxu0 0.0
    %184 = vmatpush1.msra.mxu0 0.0
    %185 = vmatprep.subr.mxu0 0.0
    %186 = vmatpush1.msra.mxu0 0.0
    %187 = vmatprep.subr.mxu0 0.0
    %188 = vmatpush1.msra.mxu0 0.0
    %189 = vmatprep.subr.mxu0 0.0
    %190 = vmatpush1.msra.mxu0 0.0
    %191 = vmatprep.subr.mxu0 0.0
    %192 = vmatpush1.msra.mxu0 0.0
    %193 = vmatprep.subr.mxu0 0.0
    %194 = vmatpush1.msra.mxu0 0.0
    %195 = vmatprep.subr.mxu0 0.0
    %196 = vmatpush1.msra.mxu0 0.0
    %197 = vmatprep.subr.mxu0 0.0
    %198 = vmatpush1.msra.mxu0 0.0
    %199 = vmatprep.subr.mxu0 0.0
    %200 = vmatpush1.msra.mxu0 0.0
    %201 = vmatprep.subr.mxu0 0.0
    %202 = vmatpush1.msra.mxu0 0.0
    %203 = vmatprep.subr.mxu0 0.0
    %204 = vmatpush1.msra.mxu0 0.0
    %205 = vmatprep.subr.mxu0 0.0
    %206 = vmatpush1.msra.mxu0 0.0
    %207 = vmatprep.subr.mxu0 0.0
    %208 = vmatpush1.msra.mxu0 0.0
    %209 = vmatprep.subr.mxu0 0.0
    %210 = vmatpush1.msra.mxu0 0.0
    %211 = vmatprep.subr.mxu0 0.0
    %212 = vmatpush1.msra.mxu0 0.0
    %213 = vmatprep.subr.mxu0 0.0
    %214 = vmatpush1.msra.mxu0 0.0
    %215 = vmatprep.subr.mxu0 0.0
    %216 = vmatpush1.msra.mxu0 0.0
    %217 = vmatprep.subr.mxu0 0.0
    %218 = vmatpush1.msra.mxu0 0.0
    %219 = vmatprep.subr.mxu0 0.0
    %220 = vmatpush1.msra.mxu0 0.0
    %221 = vmatprep.mubr.f32.mxu0 0.0
    %222 = vmatmul.mubr.f32.gmra.mrb[0].mxu0 %v155
    %v223 = vpop.f32.mrb[0].mxu0
    %v224 = vadd.f32 %v151, %v223
    %v225 = vpop.f32.mrb[0].mxu0
    %226 = vdwg.mxu0
    %v227 = vadd.f32 %v27, %v224
    %228 = vst.msk [vmem:[#allocation2] sm:$0xff] %vm28, %v227
    // Predicated region
    $region30: #{tpu_custom_call.1} parent=1 // pred_check
      _
    $region31: #{tpu_custom_call.1} parent=1 // pred_check_branch
      %230 = sbr.rel (0) target = $region33
    $region32: #{tpu_custom_call.1} parent=1 // pred_region
      %s232 = ssub.s32 128, 128
      %233 = vsyncadd [#allocation3], %s232
      %s235 = sshll.u32 [#allocation2], 4
      %s236 = int_to_ptr.vmem [resolvable:$true] %s235
      %238 = dma.vmem_to_hbm [thread:$0]  %s236, 128, %s7, [#allocation3]
    $region33: #{tpu_custom_call.1} parent=1 // pred_fallthru
      _
    // Predicated region
    $region34: #{tpu_custom_call.1} parent=1 // pred_check
      _
    $region35: #{tpu_custom_call.1} parent=1 // pred_check_branch
      %240 = sbr.rel (0) target = $region37
    $region36: #{tpu_custom_call.1} parent=1 // pred_region
      %241 = dma.done [#allocation3], 128
    $region37: #{tpu_custom_call.1} parent=1 // pred_fallthru
      _
    %242 = vsyncpa [#allocation3], 1

</llo_original>
